<compile_context>
chip_gen: v7x
topology: tpu7x:2x2x1
jax: 0.10.0
libtpu: 0.0.40
codegen_flags: <defaults>
</compile_context>

<pallas_src>
import jax
import jax.numpy as jnp
from jax.experimental import pallas as pl
from jax.experimental.pallas import tpu as pltpu

# ---- logical sizes implied by the module (synthetic Environment) ----
STATE_SIZE = 8          # env.state_size
NUM_ACTIONS = 4         # env.number_of_actions
H1 = 256
H2 = 128
BATCH = 2

NP = 128                # w3 padded output width (MXU-friendly); store is sliced


def _round_up(n, m):
    return ((n + m - 1) // m) * m


def _select_batch_tiling(B):
    """Pick (padded_batch, batch_tile, num_tiles).

    Larger tiles amortize the ~0.35us per-grid-step overhead, but the tile is
    capped so that (a) batch over-padding stays below ~25% of B and (b) the
    grid has >=2 steps once the batch is >=256 rows so v7x megacore can shard
    the batch axis across both TensorCores.
    """
    pb8 = _round_up(B, 8)          # f32 sublane multiple
    tb = 8
    for cand in (512, 256, 128, 64, 32, 16, 8):
        if cand <= pb8 or cand == 8:
            waste = _round_up(B, cand) - B
            if waste <= max(B // 4, 7):
                tb = cand
                break
    pb = _round_up(B, tb)
    # v7x: ensure >=2 grid steps for mid/large batches (no-op on v5e/v6e).
    if pb >= 256 and pb // tb < 2:
        tb //= 2
    return pb, tb, pb // tb


def _qnet_kernel(x_ref, w1_ref, b1_ref, w2_ref, b2_ref, w3_ref, b3_ref, o_ref):
    # x: (tb, STATE_SIZE) f32.  Weights bf16 (pre-cast once), biases f32.
    x = x_ref[...]

    # Layer 1: Linear(8, 256) + ReLU.  K=8 contraction -- the MXU pads it
    # internally; no HBM-side zero padding needed.
    h1 = jnp.dot(x.astype(jnp.bfloat16), w1_ref[...],
                 preferred_element_type=jnp.float32) + b1_ref[...]
    h1 = jnp.maximum(h1, 0.0)

    # Layer 2: Linear(256, 128) + ReLU.
    h2 = jnp.dot(h1.astype(jnp.bfloat16), w2_ref[...],
                 preferred_element_type=jnp.float32) + b2_ref[...]
    h2 = jnp.maximum(h2, 0.0)

    # Layer 3: Linear(128, num_actions).  w3 is zero-padded to 128 output
    # lanes for the MXU; only the first NUM_ACTIONS columns are stored
    # (narrow HBM write).
    y = jnp.dot(h2.astype(jnp.bfloat16), w3_ref[...],
                preferred_element_type=jnp.float32)
    o_ref[...] = (y[:, :NUM_ACTIONS] + b3_ref[...]).astype(o_ref.dtype)


def qnetwork_forward(x, params):
    """x: (B, STATE_SIZE) float32; params from pack_params().
    Returns (B, NUM_ACTIONS) float32."""
    B = x.shape[0]
    pb, tb, nb = _select_batch_tiling(B)

    # Zero-pad the batch (sublane/tile multiple only -- features stay at 8).
    if pb != B:
        x = jnp.zeros((pb, STATE_SIZE), x.dtype).at[:B].set(x)

    def resident(a):
        # Constant index_map: operand is DMA'd into VMEM once and stays
        # resident across the grid; single-buffered since the block never
        # changes (saves the pointless second buffer).
        return pl.BlockSpec(a.shape, lambda *_: (0,) * a.ndim,
                            pipeline_mode=pl.Buffered(buffer_count=1))

    y = pl.pallas_call(
        _qnet_kernel,
        out_shape=jax.ShapeDtypeStruct((pb, NUM_ACTIONS), jnp.float32),
        grid=(nb,),
        in_specs=[
            pl.BlockSpec((tb, STATE_SIZE), lambda i: (i, 0)),   # x batch tile
            resident(params["w1"]), resident(params["b1"]),
            resident(params["w2"]), resident(params["b2"]),
            resident(params["w3"]), resident(params["b3"]),
        ],
        out_specs=pl.BlockSpec((tb, NUM_ACTIONS), lambda i: (i, 0)),
        compiler_params=pltpu.CompilerParams(
            dimension_semantics=("parallel",),      # megacore batch sharding
        ),
    )(x, params["w1"], params["b1"], params["w2"], params["b2"],
      params["w3"], params["b3"])

    return y[:B]


def init_params(key):
    """f32 logical parameters with PyTorch nn.Linear-style init, stored (in, out)."""
    ks = jax.random.split(key, 6)

    def lin(kw, kb, fan_in, fan_out):
        bound = 1.0 / jnp.sqrt(fan_in)
        w = jax.random.uniform(kw, (fan_in, fan_out), jnp.float32, -bound, bound)
        b = jax.random.uniform(kb, (1, fan_out), jnp.float32, -bound, bound)
        return w, b

    w1, b1 = lin(ks[0], ks[1], STATE_SIZE, H1)
    w2, b2 = lin(ks[2], ks[3], H1, H2)
    w3, b3 = lin(ks[4], ks[5], H2, NUM_ACTIONS)
    return {"w1": w1, "b1": b1, "w2": w2, "b2": b2, "w3": w3, "b3": b3}


def pack_params(p):
    """One-time packing for the kernel: weights -> bf16 (half the DMA, native
    bf16 MXU passes with f32 accumulation); w3 zero-padded to NP=128 output
    columns for the MXU.  Biases stay f32 (added on the f32 accumulator path)."""
    w3p = jnp.zeros((H2, NP), jnp.float32).at[:, :NUM_ACTIONS].set(p["w3"])
    return {
        "w1": p["w1"].astype(jnp.bfloat16),
        "b1": p["b1"],
        "w2": p["w2"].astype(jnp.bfloat16),
        "b2": p["b2"],
        "w3": w3p.astype(jnp.bfloat16),
        "b3": p["b3"],                      # (1, NUM_ACTIONS) f32
    }


if __name__ == "__main__":
    key = jax.random.PRNGKey(0)
    kx, kp = jax.random.split(key)

    x = jax.random.normal(kx, (BATCH, STATE_SIZE), dtype=jnp.float32)
    params_f32 = init_params(kp)
    params = pack_params(params_f32)

    fwd = jax.jit(qnetwork_forward)
    y = fwd(x, params)
    jax.block_until_ready(y)

    # Plain-JAX f32 reference; the bf16 weight cast introduces only a small
    # relative error (tolerance sized accordingly).
    h1 = jnp.maximum(x @ params_f32["w1"] + params_f32["b1"], 0.0)
    h2 = jnp.maximum(h1 @ params_f32["w2"] + params_f32["b2"], 0.0)
    y_ref = h2 @ params_f32["w3"] + params_f32["b3"]

    assert y.shape == (BATCH, NUM_ACTIONS)
    assert jnp.allclose(y, y_ref, atol=3e-2, rtol=3e-2), float(
        jnp.max(jnp.abs(y - y_ref)))

    print("KERNEL_OK")
</pallas_src>

<mosaic_0001>
module attributes {stable_mosaic.version = 11 : i64} {
  func.func @_qnet_kernel(%arg0: i32, %arg1: memref<8x8xf32, #tpu.memory_space<vmem>>, %arg2: memref<8x256xbf16, #tpu.memory_space<vmem>>, %arg3: memref<1x256xf32, #tpu.memory_space<vmem>>, %arg4: memref<256x128xbf16, #tpu.memory_space<vmem>>, %arg5: memref<1x128xf32, #tpu.memory_space<vmem>>, %arg6: memref<128x128xbf16, #tpu.memory_space<vmem>>, %arg7: memref<1x4xf32, #tpu.memory_space<vmem>>, %arg8: memref<8x4xf32, #tpu.memory_space<vmem>>) attributes {dimension_semantics = [#tpu.dimension_semantics<parallel>], iteration_bounds = array<i64: 1>, scalar_prefetch = 0 : i64, scratch_operands = 0 : i64, tpu.core_type = #tpu.core_type<tc>, window_params = [{transform_indices = @transform_0, window_bounds = array<i64: 8, 8>}, {pipeline_mode = #tpu.pipeline_mode<synchronous>, transform_indices = @transform_1, window_bounds = array<i64: 8, 256>}, {pipeline_mode = #tpu.pipeline_mode<synchronous>, transform_indices = @transform_2, window_bounds = array<i64: 1, 256>}, {pipeline_mode = #tpu.pipeline_mode<synchronous>, transform_indices = @transform_3, window_bounds = array<i64: 256, 128>}, {pipeline_mode = #tpu.pipeline_mode<synchronous>, transform_indices = @transform_4, window_bounds = array<i64: 1, 128>}, {pipeline_mode = #tpu.pipeline_mode<synchronous>, transform_indices = @transform_5, window_bounds = array<i64: 128, 128>}, {pipeline_mode = #tpu.pipeline_mode<synchronous>, transform_indices = @transform_6, window_bounds = array<i64: 1, 4>}, {transform_indices = @transform_7, window_bounds = array<i64: 8, 4>}]} {
    %c0 = arith.constant 0 : index
    %c0_0 = arith.constant 0 : index
    %0 = vector.load %arg1[%c0, %c0_0] : memref<8x8xf32, #tpu.memory_space<vmem>>, vector<8x8xf32>
    %1 = arith.truncf %0 : vector<8x8xf32> to vector<8x8xbf16>
    %c0_1 = arith.constant 0 : index
    %c0_2 = arith.constant 0 : index
    %2 = vector.load %arg2[%c0_1, %c0_2] : memref<8x256xbf16, #tpu.memory_space<vmem>>, vector<8x256xbf16>
    %cst = arith.constant dense<0.000000e+00> : vector<8x256xf32>
    %3 = tpu.matmul %1, %2, %cst {dimension_numbers = #tpu.dot_dimension_numbers<[1], [0], [0], [1], [0, 0, 1, 1], [], []>} : vector<8x8xbf16>, vector<8x256xbf16>, vector<8x256xf32> -> vector<8x256xf32>
    %c0_3 = arith.constant 0 : index
    %c0_4 = arith.constant 0 : index
    %4 = vector.load %arg3[%c0_3, %c0_4] : memref<1x256xf32, #tpu.memory_space<vmem>>, vector<1x256xf32>
    %5 = vector.broadcast %4 : vector<1x256xf32> to vector<8x256xf32>
    %6 = arith.addf %3, %5 : vector<8x256xf32>
    %cst_5 = arith.constant 0.000000e+00 : f32
    %7 = vector.broadcast %cst_5 : f32 to vector<8x256xf32>
    %8 = arith.maximumf %6, %7 : vector<8x256xf32>
    %9 = arith.truncf %8 : vector<8x256xf32> to vector<8x256xbf16>
    %c0_6 = arith.constant 0 : index
    %c0_7 = arith.constant 0 : index
    %10 = vector.load %arg4[%c0_6, %c0_7] : memref<256x128xbf16, #tpu.memory_space<vmem>>, vector<256x128xbf16>
    %cst_8 = arith.constant dense<0.000000e+00> : vector<8x128xf32>
    %11 = tpu.matmul %9, %10, %cst_8 {dimension_numbers = #tpu.dot_dimension_numbers<[1], [0], [0], [1], [0, 0, 1, 1], [], []>} : vector<8x256xbf16>, vector<256x128xbf16>, vector<8x128xf32> -> vector<8x128xf32>
    %c0_9 = arith.constant 0 : index
    %c0_10 = arith.constant 0 : index
    %12 = vector.load %arg5[%c0_9, %c0_10] : memref<1x128xf32, #tpu.memory_space<vmem>>, vector<1x128xf32>
    %13 = vector.broadcast %12 : vector<1x128xf32> to vector<8x128xf32>
    %14 = arith.addf %11, %13 : vector<8x128xf32>
    %cst_11 = arith.constant 0.000000e+00 : f32
    %15 = vector.broadcast %cst_11 : f32 to vector<8x128xf32>
    %16 = arith.maximumf %14, %15 : vector<8x128xf32>
    %17 = arith.truncf %16 : vector<8x128xf32> to vector<8x128xbf16>
    %c0_12 = arith.constant 0 : index
    %c0_13 = arith.constant 0 : index
    %18 = vector.load %arg6[%c0_12, %c0_13] : memref<128x128xbf16, #tpu.memory_space<vmem>>, vector<128x128xbf16>
    %cst_14 = arith.constant dense<0.000000e+00> : vector<8x128xf32>
    %19 = tpu.matmul %17, %18, %cst_14 {dimension_numbers = #tpu.dot_dimension_numbers<[1], [0], [0], [1], [0, 0, 1, 1], [], []>} : vector<8x128xbf16>, vector<128x128xbf16>, vector<8x128xf32> -> vector<8x128xf32>
    %20 = vector.extract_strided_slice %19 {offsets = [0, 0], sizes = [8, 4], strides = [1, 1]} : vector<8x128xf32> to vector<8x4xf32>
    %c0_15 = arith.constant 0 : index
    %c0_16 = arith.constant 0 : index
    %21 = vector.load %arg7[%c0_15, %c0_16] : memref<1x4xf32, #tpu.memory_space<vmem>>, vector<1x4xf32>
    %22 = vector.broadcast %21 : vector<1x4xf32> to vector<8x4xf32>
    %23 = arith.addf %20, %22 : vector<8x4xf32>
    %c0_17 = arith.constant 0 : index
    %c0_18 = arith.constant 0 : index
    %24 = vector.load %arg8[%c0_17, %c0_18] : memref<8x4xf32, #tpu.memory_space<vmem>>, vector<8x4xf32>
    tpu.vector_store %arg8[%c0_17, %c0_18], %23 {strides = array<i32>} : memref<8x4xf32, #tpu.memory_space<vmem>>, vector<8x4xf32>,
    return
  }
  func.func @transform_0(%arg0: i32) -> (i32, i32) {
    %c0_i32 = arith.constant 0 : i32
    %c0_i32_0 = arith.constant 0 : i32
    return %arg0, %c0_i32 : i32, i32
  }
  func.func @transform_1(%arg0: i32) -> (i32, i32) {
    %c0_i32 = arith.constant 0 : i32
    %c0_i32_0 = arith.constant 0 : i32
    %c0_i32_1 = arith.constant 0 : i32
    return %c0_i32, %c0_i32_0 : i32, i32
  }
  func.func @transform_2(%arg0: i32) -> (i32, i32) {
    %c0_i32 = arith.constant 0 : i32
    %c0_i32_0 = arith.constant 0 : i32
    %c0_i32_1 = arith.constant 0 : i32
    return %c0_i32, %c0_i32_0 : i32, i32
  }
  func.func @transform_3(%arg0: i32) -> (i32, i32) {
    %c0_i32 = arith.constant 0 : i32
    %c0_i32_0 = arith.constant 0 : i32
    %c0_i32_1 = arith.constant 0 : i32
    return %c0_i32, %c0_i32_0 : i32, i32
  }
  func.func @transform_4(%arg0: i32) -> (i32, i32) {
    %c0_i32 = arith.constant 0 : i32
    %c0_i32_0 = arith.constant 0 : i32
    %c0_i32_1 = arith.constant 0 : i32
    return %c0_i32, %c0_i32_0 : i32, i32
  }
  func.func @transform_5(%arg0: i32) -> (i32, i32) {
    %c0_i32 = arith.constant 0 : i32
    %c0_i32_0 = arith.constant 0 : i32
    %c0_i32_1 = arith.constant 0 : i32
    return %c0_i32, %c0_i32_0 : i32, i32
  }
  func.func @transform_6(%arg0: i32) -> (i32, i32) {
    %c0_i32 = arith.constant 0 : i32
    %c0_i32_0 = arith.constant 0 : i32
    %c0_i32_1 = arith.constant 0 : i32
    return %c0_i32, %c0_i32_0 : i32, i32
  }
  func.func @transform_7(%arg0: i32) -> (i32, i32) {
    %c0_i32 = arith.constant 0 : i32
    %c0_i32_0 = arith.constant 0 : i32
    return %arg0, %c0_i32 : i32, i32
  }
}

</mosaic_0001>

<llo_original>
// kernel: qnetwork_forward.1
$region0: #{qnetwork_forward.1}
  #allocation0 [shape = 'u32[]', space=smem, size = 0x4, offset = 0x4, fixed_abs, tag = 'smem constant byte address 0x4 - core index']
  #allocation1 [shape = 'u32[144,128]{1,0:T(1,128)}', space=vmem, size = 0x12000, scoped, tag = 'internal scratch']
  %s0 = inlined_call_operand.vmem [shape: f32[8,8], index: 0, kind: input, shape index: {}]
  %s1 = inlined_call_operand.vmem [shape: bf16[8,256], index: 1, kind: input, shape index: {}]
  %s2 = inlined_call_operand.vmem [shape: f32[1,256], index: 2, kind: input, shape index: {}]
  %s3 = inlined_call_operand.hbm [shape: bf16[256,128], index: 3, kind: input, shape index: {}]
  %s4 = inlined_call_operand.vmem [shape: f32[1,128], index: 4, kind: input, shape index: {}]
  %s5 = inlined_call_operand.hbm [shape: bf16[128,128], index: 5, kind: input, shape index: {}]
  %s6 = inlined_call_operand.vmem [shape: f32[1,4], index: 6, kind: input, shape index: {}]
  %s7 = inlined_call_operand.vmem [shape: f32[8,4], index: 7, kind: output, shape index: {}]
  %s8 = sld [smem:[#allocation0]]
  $region46: #{qnetwork_forward.1} parent=0
    _
  %s10 = ssub.s32 1, %s8
  %s11 = scalar_select 0, %s10, %s8
  $region1: #{qnetwork_forward.1} parent=0
    #allocation2 [shape = 'u8[65536]{0}', space=vmem, size = 0x10000, scoped, tag = 'input window, operand 3, single buffered']
    #allocation3 [shape = 's32[1]{0}', space=sflag, size = 0x4, scoped, tag = 'scoped memory for qnetwork_forward.1']
    #allocation4 [shape = 'u8[32768]{0}', space=vmem, size = 0x8000, scoped, tag = 'input window, operand 5, single buffered']
    #allocation5 [shape = 's32[1]{0}', space=sflag, size = 0x4, scoped, tag = 'scoped memory for qnetwork_forward.1']
    %12 = vsyncpa [#allocation3], 0
    %13 = vsyncpa [#allocation5], 0
    // Predicated region
    $region2: #{qnetwork_forward.1} parent=1 // pred_check
      _
    $region3: #{qnetwork_forward.1} parent=1 // pred_check_branch
      %15 = sbr.rel (0) target = $region5
    $region4: #{qnetwork_forward.1} parent=1 // pred_region
      _
    $region5: #{qnetwork_forward.1} parent=1 // pred_fallthru
      _
    // Predicated region
    $region6: #{qnetwork_forward.1} parent=1 // pred_check
      _
    $region7: #{qnetwork_forward.1} parent=1 // pred_check_branch
      %17 = sbr.rel (0) target = $region9
    $region8: #{qnetwork_forward.1} parent=1 // pred_region
      _
    $region9: #{qnetwork_forward.1} parent=1 // pred_fallthru
      _
    // Predicated region
    $region10: #{qnetwork_forward.1} parent=1 // pred_check
      _
    $region11: #{qnetwork_forward.1} parent=1 // pred_check_branch
      %19 = sbr.rel (0) target = $region13
    $region12: #{qnetwork_forward.1} parent=1 // pred_region
      _
    $region13: #{qnetwork_forward.1} parent=1 // pred_fallthru
      _
    // Predicated region
    $region14: #{qnetwork_forward.1} parent=1 // pred_check
      _
    $region15: #{qnetwork_forward.1} parent=1 // pred_check_branch
      %21 = sbr.rel (0) target = $region17
    $region16: #{qnetwork_forward.1} parent=1 // pred_region
      %s23 = ssub.s32 2048, 2048
      %24 = vsyncadd [#allocation3], %s23
      %s25 = sshll.u32 [#allocation2], 4
      %s26 = int_to_ptr.vmem [resolvable:$true] %s25
      %31 = dma.hbm_to_vmem [thread:$0]  %s3, 2048, %s26, [#allocation3], 64, 64, 4
    $region17: #{qnetwork_forward.1} parent=1 // pred_fallthru
      _
    // Predicated region
    $region18: #{qnetwork_forward.1} parent=1 // pred_check
      _
    $region19: #{qnetwork_forward.1} parent=1 // pred_check_branch
      %33 = sbr.rel (0) target = $region21
    $region20: #{qnetwork_forward.1} parent=1 // pred_region
      _
    $region21: #{qnetwork_forward.1} parent=1 // pred_fallthru
      _
    // Predicated region
    $region22: #{qnetwork_forward.1} parent=1 // pred_check
      _
    $region23: #{qnetwork_forward.1} parent=1 // pred_check_branch
      %35 = sbr.rel (0) target = $region25
    $region24: #{qnetwork_forward.1} parent=1 // pred_region
      %s37 = ssub.s32 1024, 1024
      %38 = vsyncadd [#allocation5], %s37
      %s39 = sshll.u32 [#allocation4], 4
      %s40 = int_to_ptr.vmem [resolvable:$true] %s39
      %45 = dma.hbm_to_vmem [thread:$0]  %s5, 1024, %s40, [#allocation5], 64, 64, 4
    $region25: #{qnetwork_forward.1} parent=1 // pred_fallthru
      _
    // Predicated region
    $region26: #{qnetwork_forward.1} parent=1 // pred_check
      _
    $region27: #{qnetwork_forward.1} parent=1 // pred_check_branch
      %47 = sbr.rel (0) target = $region29
    $region28: #{qnetwork_forward.1} parent=1 // pred_region
      _
    $region29: #{qnetwork_forward.1} parent=1 // pred_fallthru
      _
    // Predicated region
    $region30: #{qnetwork_forward.1} parent=1 // pred_check
      _
    $region31: #{qnetwork_forward.1} parent=1 // pred_check_branch
      %49 = sbr.rel (0) target = $region33
    $region32: #{qnetwork_forward.1} parent=1 // pred_region
      %50 = dma.done [#allocation3], 2048
    $region33: #{qnetwork_forward.1} parent=1 // pred_fallthru
      _
    // Predicated region
    $region34: #{qnetwork_forward.1} parent=1 // pred_check
      _
    $region35: #{qnetwork_forward.1} parent=1 // pred_check_branch
      %52 = sbr.rel (0) target = $region37
    $region36: #{qnetwork_forward.1} parent=1 // pred_region
      %53 = dma.done [#allocation5], 1024
    $region37: #{qnetwork_forward.1} parent=1 // pred_fallthru
      _
    %v55 = vld [vmem:[%s0] sm:$0xff]
    %v56 = vpack.c.bf16 %v55, %v55
    %v57 = vld [vmem:[%s1] sm:$0xff]
    %v58 = vld [vmem:[%s2] sm:$0x3]
    %v60 = vlaneseq
    %v61 = vshrl.u32 %v60, 7
    %v62 = vsub.s32 0, %v61
    %v63 = vrot.slane %v58, %v62
    %v64 = vlaneseq
    %v65 = vshrl.u32 %v64, 7
    %v66 = vsub.s32 1, %v65
    %v67 = vrot.slane %v58, %v66
    %v71 = vunpack.c.l.b16 %v57
    %v72 = vunpack.c.h.b16 %v57
    %v73 = vpack.c.b16 %v71, %v71
    %v74 = vpack.c.b16 %v72, %v72
    %vm75 = vcmask 64512
    %v77 = vsel %vm75, %v56, 0
    %vm79 = vcmask 1043456
    %v81 = vsel %vm79, %v73, 0
    %v84 = vsel %vm79, %v74, 0
    %86 = vmatprep.subr.bf16.mxu0 %v84
    %87 = vmatpush1.bf16.msra.mxu0 %v81
    %88 = vmatprep.subr.bf16.mxu0 0
    %89 = vmatpush1.bf16.msra.mxu0 0
    %90 = vmatprep.subr.bf16.mxu0 0
    %91 = vmatpush1.bf16.msra.mxu0 0
    %92 = vmatprep.subr.bf16.mxu0 0
    %93 = vmatpush1.bf16.msra.mxu0 0
    %94 = vmatprep.subr.bf16.mxu0 0
    %95 = vmatpush1.bf16.msra.mxu0 0
    %96 = vmatprep.subr.bf16.mxu0 0
    %97 = vmatpush1.bf16.msra.mxu0 0
    %98 = vmatprep.subr.bf16.mxu0 0
    %99 = vmatpush1.bf16.msra.mxu0 0
    %100 = vmatprep.subr.bf16.mxu0 0
    %101 = vmatpush1.bf16.msra.mxu0 0
    %102 = vmatprep.subr.bf16.mxu0 0
    %103 = vmatpush1.bf16.msra.mxu0 0
    %104 = vmatprep.subr.bf16.mxu0 0
    %105 = vmatpush1.bf16.msra.mxu0 0
    %106 = vmatprep.subr.bf16.mxu0 0
    %107 = vmatpush1.bf16.msra.mxu0 0
    %108 = vmatprep.subr.bf16.mxu0 0
    %109 = vmatpush1.bf16.msra.mxu0 0
    %110 = vmatprep.subr.bf16.mxu0 0
    %111 = vmatpush1.bf16.msra.mxu0 0
    %112 = vmatprep.subr.bf16.mxu0 0
    %113 = vmatpush1.bf16.msra.mxu0 0
    %114 = vmatprep.subr.bf16.mxu0 0
    %115 = vmatpush1.bf16.msra.mxu0 0
    %116 = vmatprep.subr.bf16.mxu0 0
    %117 = vmatpush1.bf16.msra.mxu0 0
    %118 = vmatprep.mubr.bf16.mxu0 0
    %119 = vmatmul.mubr.bf16.gmra.mrb[0].mxu0 %v77
    %v120 = vpop.f32.mrb[0].mxu0
    %v121 = vadd.f32 %v63, %v120
    %v122 = vpop.f32.mrb[0].mxu0
    %v123 = vadd.f32 %v67, %v122
    %v124 = vpop.f32.mrb[0].mxu0
    %v125 = vpop.f32.mrb[0].mxu0
    %126 = vdwg.mxu0
    %v127 = vmax.f32 %v121, 0.0
    %v128 = vmax.f32 %v123, 0.0
    %v129 = vpack.c.bf16 %v127, %v127
    %v130 = vpack.c.bf16 %v128, %v128
    %v131 = vld [vmem:[#allocation2] sm:$0xf]
    %v132 = vld [vmem:[#allocation2 + $0x4] sm:$0xf]
    %v133 = vld [vmem:[#allocation2 + $0x8] sm:$0xf]
    %v134 = vld [vmem:[#allocation2 + $0xc] sm:$0xf]
    %v135 = vld [vmem:[#allocation2 + $0x10] sm:$0xf]
    %v136 = vld [vmem:[#allocation2 + $0x14] sm:$0xf]
    %v137 = vld [vmem:[#allocation2 + $0x18] sm:$0xf]
    %v138 = vld [vmem:[#allocation2 + $0x1c] sm:$0xf]
    %v139 = vld [vmem:[#allocation2 + $0x20] sm:$0xf]
    %v140 = vld [vmem:[#allocation2 + $0x24] sm:$0xf]
    %v141 = vld [vmem:[#allocation2 + $0x28] sm:$0xf]
    %v142 = vld [vmem:[#allocation2 + $0x2c] sm:$0xf]
    %v143 = vld [vmem:[#allocation2 + $0x30] sm:$0xf]
    %v144 = vld [vmem:[#allocation2 + $0x34] sm:$0xf]
    %v145 = vld [vmem:[#allocation2 + $0x38] sm:$0xf]
    %v146 = vld [vmem:[#allocation2 + $0x3c] sm:$0xf]
    %v147 = vld [vmem:[#allocation2 + $0x40] sm:$0xf]
    %v148 = vld [vmem:[#allocation2 + $0x44] sm:$0xf]
    %v149 = vld [vmem:[#allocation2 + $0x48] sm:$0xf]
    %v150 = vld [vmem:[#allocation2 + $0x4c] sm:$0xf]
    %v151 = vld [vmem:[#allocation2 + $0x50] sm:$0xf]
    %v152 = vld [vmem:[#allocation2 + $0x54] sm:$0xf]
    %v153 = vld [vmem:[#allocation2 + $0x58] sm:$0xf]
    %v154 = vld [vmem:[#allocation2 + $0x5c] sm:$0xf]
    %v155 = vld [vmem:[#allocation2 + $0x60] sm:$0xf]
    %v156 = vld [vmem:[#allocation2 + $0x64] sm:$0xf]
    %v157 = vld [vmem:[#allocation2 + $0x68] sm:$0xf]
    %v158 = vld [vmem:[#allocation2 + $0x6c] sm:$0xf]
    %v159 = vld [vmem:[#allocation2 + $0x70] sm:$0xf]
    %v160 = vld [vmem:[#allocation2 + $0x74] sm:$0xf]
    %v161 = vld [vmem:[#allocation2 + $0x78] sm:$0xf]
    %v162 = vld [vmem:[#allocation2 + $0x7c] sm:$0xf]
    %v163 = vld [vmem:[%s4] sm:$0x1]
    %v165 = vlaneseq
    %v166 = vshrl.u32 %v165, 7
    %v167 = vsub.s32 0, %v166
    %v168 = vrot.slane %v163, %v167
    %v202 = vunpack.c.l.b16 %v131
    %v203 = vunpack.c.l.b16 %v132
    %v204 = vunpack.c.l.b16 %v133
    %v205 = vunpack.c.l.b16 %v134
    %v206 = vunpack.c.l.b16 %v135
    %v207 = vunpack.c.l.b16 %v136
    %v208 = vunpack.c.l.b16 %v137
    %v209 = vunpack.c.l.b16 %v138
    %v210 = vunpack.c.l.b16 %v139
    %v211 = vunpack.c.l.b16 %v140
    %v212 = vunpack.c.l.b16 %v141
    %v213 = vunpack.c.l.b16 %v142
    %v214 = vunpack.c.l.b16 %v143
    %v215 = vunpack.c.l.b16 %v144
    %v216 = vunpack.c.l.b16 %v145
    %v217 = vunpack.c.l.b16 %v146
    %v218 = vunpack.c.l.b16 %v147
    %v219 = vunpack.c.l.b16 %v148
    %v220 = vunpack.c.l.b16 %v149
    %v221 = vunpack.c.l.b16 %v150
    %v222 = vunpack.c.l.b16 %v151
    %v223 = vunpack.c.l.b16 %v152
    %v224 = vunpack.c.l.b16 %v153
    %v225 = vunpack.c.l.b16 %v154
    %v226 = vunpack.c.l.b16 %v155
    %v227 = vunpack.c.l.b16 %v156
    %v228 = vunpack.c.l.b16 %v157
    %v229 = vunpack.c.l.b16 %v158
    %v230 = vunpack.c.l.b16 %v159
    %v231 = vunpack.c.l.b16 %v160
    %v232 = vunpack.c.l.b16 %v161
    %v233 = vunpack.c.l.b16 %v162
    %v234 = vpack.c.b16 %v203, %v202
    %v235 = vpack.c.b16 %v205, %v204
    %v236 = vpack.c.b16 %v207, %v206
    %v237 = vpack.c.b16 %v209, %v208
    %v238 = vpack.c.b16 %v211, %v210
    %v239 = vpack.c.b16 %v213, %v212
    %v240 = vpack.c.b16 %v215, %v214
    %v241 = vpack.c.b16 %v217, %v216
    %v242 = vpack.c.b16 %v219, %v218
    %v243 = vpack.c.b16 %v221, %v220
    %v244 = vpack.c.b16 %v223, %v222
    %v245 = vpack.c.b16 %v225, %v224
    %v246 = vpack.c.b16 %v227, %v226
    %v247 = vpack.c.b16 %v229, %v228
    %v248 = vpack.c.b16 %v231, %v230
    %v249 = vpack.c.b16 %v233, %v232
    %266 = vmatprep.subr.bf16.mxu0 0
    %267 = vmatpush1.bf16.msra.mxu0 %v234
    %268 = vmatprep.subr.bf16.mxu0 0
    %269 = vmatpush1.bf16.msra.mxu0 %v235
    %270 = vmatprep.subr.bf16.mxu0 0
    %271 = vmatpush1.bf16.msra.mxu0 %v236
    %272 = vmatprep.subr.bf16.mxu0 0
    %273 = vmatpush1.bf16.msra.mxu0 %v237
    %274 = vmatprep.subr.bf16.mxu0 0
    %275 = vmatpush1.bf16.msra.mxu0 %v238
    %276 = vmatprep.subr.bf16.mxu0 0
    %277 = vmatpush1.bf16.msra.mxu0 %v239
    %278 = vmatprep.subr.bf16.mxu0 0
    %279 = vmatpush1.bf16.msra.mxu0 %v240
    %280 = vmatprep.subr.bf16.mxu0 0
    %281 = vmatpush1.bf16.msra.mxu0 %v241
    %282 = vmatprep.subr.bf16.mxu0 0
    %283 = vmatpush1.bf16.msra.mxu0 %v242
    %284 = vmatprep.subr.bf16.mxu0 0
    %285 = vmatpush1.bf16.msra.mxu0 %v243
    %286 = vmatprep.subr.bf16.mxu0 0
    %287 = vmatpush1.bf16.msra.mxu0 %v244
    %288 = vmatprep.subr.bf16.mxu0 0
    %289 = vmatpush1.bf16.msra.mxu0 %v245
    %290 = vmatprep.subr.bf16.mxu0 0
    %291 = vmatpush1.bf16.msra.mxu0 %v246
    %292 = vmatprep.subr.bf16.mxu0 0
    %293 = vmatpush1.bf16.msra.mxu0 %v247
    %294 = vmatprep.subr.bf16.mxu0 0
    %295 = vmatpush1.bf16.msra.mxu0 %v248
    %296 = vmatprep.subr.bf16.mxu0 0
    %297 = vmatpush1.bf16.msra.mxu0 %v249
    %298 = vmatprep.mubr.bf16.mxu0 %v130
    %299 = vmatmul.mubr.bf16.gmra.mrb[0].mxu0 %v129
    %v300 = vpop.f32.mrb[0].mxu0
    %v301 = vadd.f32 %v168, %v300
    %v302 = vpop.f32.mrb[0].mxu0
    %v303 = vpop.f32.mrb[0].mxu0
    %v304 = vpop.f32.mrb[0].mxu0
    %305 = vdwg.mxu0
    %v306 = vmax.f32 %v301, 0.0
    %v307 = vpack.c.bf16 %v306, %v306
    %v308 = vld [vmem:[#allocation4] sm:$0xf]
    %v309 = vld [vmem:[#allocation4 + $0x4] sm:$0xf]
    %v310 = vld [vmem:[#allocation4 + $0x8] sm:$0xf]
    %v311 = vld [vmem:[#allocation4 + $0xc] sm:$0xf]
    %v312 = vld [vmem:[#allocation4 + $0x10] sm:$0xf]
    %v313 = vld [vmem:[#allocation4 + $0x14] sm:$0xf]
    %v314 = vld [vmem:[#allocation4 + $0x18] sm:$0xf]
    %v315 = vld [vmem:[#allocation4 + $0x1c] sm:$0xf]
    %v316 = vld [vmem:[#allocation4 + $0x20] sm:$0xf]
    %v317 = vld [vmem:[#allocation4 + $0x24] sm:$0xf]
    %v318 = vld [vmem:[#allocation4 + $0x28] sm:$0xf]
    %v319 = vld [vmem:[#allocation4 + $0x2c] sm:$0xf]
    %v320 = vld [vmem:[#allocation4 + $0x30] sm:$0xf]
    %v321 = vld [vmem:[#allocation4 + $0x34] sm:$0xf]
    %v322 = vld [vmem:[#allocation4 + $0x38] sm:$0xf]
    %v323 = vld [vmem:[#allocation4 + $0x3c] sm:$0xf]
    %v340 = vunpack.c.l.b16 %v308
    %v341 = vunpack.c.l.b16 %v309
    %v342 = vunpack.c.l.b16 %v310
    %v343 = vunpack.c.l.b16 %v311
    %v344 = vunpack.c.l.b16 %v312
    %v345 = vunpack.c.l.b16 %v313
    %v346 = vunpack.c.l.b16 %v314
    %v347 = vunpack.c.l.b16 %v315
    %v348 = vunpack.c.l.b16 %v316
    %v349 = vunpack.c.l.b16 %v317
    %v350 = vunpack.c.l.b16 %v318
    %v351 = vunpack.c.l.b16 %v319
    %v352 = vunpack.c.l.b16 %v320
    %v353 = vunpack.c.l.b16 %v321
    %v354 = vunpack.c.l.b16 %v322
    %v355 = vunpack.c.l.b16 %v323
    %v356 = vpack.c.b16 %v341, %v340
    %v357 = vpack.c.b16 %v343, %v342
    %v358 = vpack.c.b16 %v345, %v344
    %v359 = vpack.c.b16 %v347, %v346
    %v360 = vpack.c.b16 %v349, %v348
    %v361 = vpack.c.b16 %v351, %v350
    %v362 = vpack.c.b16 %v353, %v352
    %v363 = vpack.c.b16 %v355, %v354
    %372 = vmatprep.subr.bf16.mxu0 0
    %373 = vmatpush1.bf16.msra.mxu0 %v356
    %374 = vmatprep.subr.bf16.mxu0 0
    %375 = vmatpush1.bf16.msra.mxu0 %v357
    %376 = vmatprep.subr.bf16.mxu0 0
    %377 = vmatpush1.bf16.msra.mxu0 %v358
    %378 = vmatprep.subr.bf16.mxu0 0
    %379 = vmatpush1.bf16.msra.mxu0 %v359
    %380 = vmatprep.subr.bf16.mxu0 0
    %381 = vmatpush1.bf16.msra.mxu0 %v360
    %382 = vmatprep.subr.bf16.mxu0 0
    %383 = vmatpush1.bf16.msra.mxu0 %v361
    %384 = vmatprep.subr.bf16.mxu0 0
    %385 = vmatpush1.bf16.msra.mxu0 %v362
    %386 = vmatprep.subr.bf16.mxu0 0
    %387 = vmatpush1.bf16.msra.mxu0 %v363
    %388 = vmatprep.subr.bf16.mxu0 0
    %389 = vmatpush1.bf16.msra.mxu0 0
    %390 = vmatprep.subr.bf16.mxu0 0
    %391 = vmatpush1.bf16.msra.mxu0 0
    %392 = vmatprep.subr.bf16.mxu0 0
    %393 = vmatpush1.bf16.msra.mxu0 0
    %394 = vmatprep.subr.bf16.mxu0 0
    %395 = vmatpush1.bf16.msra.mxu0 0
    %396 = vmatprep.subr.bf16.mxu0 0
    %397 = vmatpush1.bf16.msra.mxu0 0
    %398 = vmatprep.subr.bf16.mxu0 0
    %399 = vmatpush1.bf16.msra.mxu0 0
    %400 = vmatprep.subr.bf16.mxu0 0
    %401 = vmatpush1.bf16.msra.mxu0 0
    %402 = vmatprep.subr.bf16.mxu0 0
    %403 = vmatpush1.bf16.msra.mxu0 0
    %404 = vmatprep.mubr.bf16.mxu0 0
    %405 = vmatmul.mubr.bf16.gmra.mrb[0].mxu0 %v307
    %v406 = vpop.f32.mrb[0].mxu0
    %v407 = vadd.f32 0.0, %v406
    %v408 = vpop.f32.mrb[0].mxu0
    %v409 = vpop.f32.mrb[0].mxu0
    %v410 = vpop.f32.mrb[0].mxu0
    %411 = vdwg.mxu0
    %v412 = vld [vmem:[%s6] sm:$0x1]
    %v414 = vlaneseq
    %v415 = vshrl.u32 %v414, 7
    %v416 = vsub.s32 0, %v415
    %v417 = vrot.slane %v412, %v416
    %v419 = vadd.f32 %v407, %v417
    %vm420 = vcmask 31744
    %421 = vst.msk [vmem:[%s7] sm:$0xff] %vm420, %v419
    // Predicated region
    $region38: #{qnetwork_forward.1} parent=1 // pred_check
      _
    $region39: #{qnetwork_forward.1} parent=1 // pred_check_branch
      %423 = sbr.rel (0) target = $region41
    $region40: #{qnetwork_forward.1} parent=1 // pred_region
      _
    $region41: #{qnetwork_forward.1} parent=1 // pred_fallthru
      _
    // Predicated region
    $region42: #{qnetwork_forward.1} parent=1 // pred_check
      _
    $region43: #{qnetwork_forward.1} parent=1 // pred_check_branch
      %425 = sbr.rel (0) target = $region45
    $region44: #{qnetwork_forward.1} parent=1 // pred_region
      _
    $region45: #{qnetwork_forward.1} parent=1 // pred_fallthru
      _
    %426 = vsyncpa [#allocation3], 1
    %427 = vsyncpa [#allocation5], 1

</llo_original>
